<compile_context>
chip_gen: v6e
topology: v6e:2x2x1
jax: 0.10.0
libtpu: 0.0.40
codegen_flags: <defaults>
</compile_context>

<pallas_src>
import jax
import jax.numpy as jnp
from jax.experimental import pallas as pl
from jax.experimental.pallas import tpu as pltpu

_MAX_LANE = 1024                 # lane (last-dim) width cap; multiple of 128 -> unmasked vst
_TARGET_BLOCK_BYTES = 4 << 20    # ~4 MiB blocks amortize per-step pipeline overhead
_MIN_GRID_STEPS = 4              # keep >= 2x TensorCores of steps for v7x megacore
_MIN_SPLIT_BYTES = 2 << 20       # only force extra grid steps for reasonably large tensors


def _scale_kernel(scale_ref, x_ref, o_ref):
    # scale_ref: SMEM (1,) f32 parameter; x_ref / o_ref: VMEM tiles of x.dtype.
    s = scale_ref[0].astype(x_ref.dtype)   # keep the multiply in x.dtype (bf16 stays packed)
    o_ref[...] = x_ref[...] * s


def _pick_lane(total: int):
    """Largest power-of-two multiple-of-128 lane width (<= _MAX_LANE) dividing total."""
    if total % 128 != 0:
        return None
    lane = 128
    while lane * 2 <= _MAX_LANE and total % (lane * 2) == 0:
        lane *= 2
    return lane


def scale_forward(x: jax.Array, scale: jax.Array, *, donate_input: bool = False) -> jax.Array:
    """Elementwise x * scale (learnable scalar). x: any shape, scale: [1]."""
    orig_shape = x.shape
    total = x.size
    itemsize = jnp.dtype(x.dtype).itemsize

    # --- Lane-dense flattening, no padding whenever total % 128 == 0 ---------
    lane = _pick_lane(total)
    padded_total = total
    flat = x.reshape(-1)
    if lane is None:
        # Rare fallback: no multiple-of-128 factorization -> pad the tail.
        lane = 128
        padded_total = pl.cdiv(total, lane) * lane
        flat = jnp.pad(flat, (0, padded_total - total))
    rows = padded_total // lane
    x2 = flat.reshape(rows, lane)

    # --- Row blocking: ~4 MiB blocks, rows per block a multiple of 8 ----------
    rows_per_block = max(8, (_TARGET_BLOCK_BYTES // (lane * itemsize)) // 8 * 8)
    # For large tensors, keep at least a few grid steps so v7x's two TCs both stream.
    if (padded_total * itemsize >= _MIN_SPLIT_BYTES
            and pl.cdiv(rows, rows_per_block) < _MIN_GRID_STEPS):
        rows_per_block = max(8, (pl.cdiv(rows, _MIN_GRID_STEPS) // 8) * 8)
    # Either a multiple of 8, or the full row extent -> satisfies the (8,128) rule.
    row_block = rows if rows <= rows_per_block else rows_per_block
    grid = (pl.cdiv(rows, row_block),)

    block_bytes = row_block * lane * itemsize
    # 2 operands x 2 pipeline buffers each + headroom; clamped so the same code
    # is safe on v7x's 64 MiB physical VMEM and exceeds v5e's 16 MiB default.
    vmem_limit = min(64 << 20, max(4 * block_bytes + (4 << 20), 16 << 20))

    scale_f32 = scale.astype(jnp.float32).reshape(-1)

    out2 = pl.pallas_call(
        _scale_kernel,
        out_shape=jax.ShapeDtypeStruct(x2.shape, x.dtype),
        grid=grid,
        in_specs=[
            pl.BlockSpec(memory_space=pltpu.MemorySpace.SMEM),  # scalar param
            pl.BlockSpec((row_block, lane), lambda i: (i, 0)),  # tiled input
        ],
        out_specs=pl.BlockSpec((row_block, lane), lambda i: (i, 0)),
        compiler_params=pltpu.CompilerParams(
            dimension_semantics=("parallel",),
            vmem_limit_bytes=vmem_limit,
        ),
        cost_estimate=pl.CostEstimate(
            flops=total,
            transcendentals=0,
            bytes_accessed=2 * total * itemsize,
        ),
        # Opt-in: reuse x's HBM buffer for the output when the caller donates x.
        input_output_aliases=({1: 0} if donate_input else {}),
    )(scale_f32, x2)

    out_flat = out2.reshape(-1)
    if padded_total != total:
        out_flat = out_flat[:total]
    return out_flat.reshape(orig_shape)


if __name__ == "__main__":
    key = jax.random.PRNGKey(0)
    B, C, H, W = 2, 4, 16, 16
    x = jax.random.normal(key, (B, C, H, W), dtype=jnp.float32)

    # Deterministic parameter init, matching nn.Parameter(torch.FloatTensor([0.001]))
    init_value = 0.001
    scale = jnp.array([init_value], dtype=jnp.float32)

    out = scale_forward(x, scale)
    out = jax.block_until_ready(out)

    # Verify against pure-JAX reference of the PyTorch forward
    ref = x * scale
    assert out.shape == x.shape and out.dtype == x.dtype
    assert jnp.allclose(out, ref, rtol=1e-6, atol=1e-6)

    print("KERNEL_OK")
</pallas_src>

<mosaic_0001>
module attributes {stable_mosaic.version = 11 : i64} {
  func.func @_scale_kernel(%arg0: i32, %arg1: memref<1xf32, #tpu.memory_space<smem>>, %arg2: memref<2x1024xf32, #tpu.memory_space<vmem>>, %arg3: memref<2x1024xf32, #tpu.memory_space<vmem>>) attributes {dimension_semantics = [#tpu.dimension_semantics<parallel>], iteration_bounds = array<i64: 1>, scalar_prefetch = 0 : i64, scratch_operands = 0 : i64, tpu.core_type = #tpu.core_type<tc>, window_params = [{transform_indices = @transform_0, window_bounds = array<i64: 1>}, {transform_indices = @transform_1, window_bounds = array<i64: 2, 1024>}, {transform_indices = @transform_2, window_bounds = array<i64: 2, 1024>}]} {
    %c0 = arith.constant 0 : index
    %0 = memref.load %arg1[%c0] : memref<1xf32, #tpu.memory_space<smem>>
    %c0_0 = arith.constant 0 : index
    %c0_1 = arith.constant 0 : index
    %1 = vector.load %arg2[%c0_0, %c0_1] : memref<2x1024xf32, #tpu.memory_space<vmem>>, vector<2x1024xf32>
    %2 = vector.broadcast %0 : f32 to vector<2x1024xf32>
    %3 = arith.mulf %1, %2 : vector<2x1024xf32>
    %c0_2 = arith.constant 0 : index
    %c0_3 = arith.constant 0 : index
    %4 = vector.load %arg3[%c0_2, %c0_3] : memref<2x1024xf32, #tpu.memory_space<vmem>>, vector<2x1024xf32>
    tpu.vector_store %arg3[%c0_2, %c0_3], %3 {strides = array<i32>} : memref<2x1024xf32, #tpu.memory_space<vmem>>, vector<2x1024xf32>,
    return
  }
  func.func @transform_0(%arg0: i32) -> i32 {
    %c0_i32 = arith.constant 0 : i32
    %c0_i32_0 = arith.constant 0 : i32
    return %c0_i32 : i32
  }
  func.func @transform_1(%arg0: i32) -> (i32, i32) {
    %c0_i32 = arith.constant 0 : i32
    %c0_i32_0 = arith.constant 0 : i32
    return %arg0, %c0_i32 : i32, i32
  }
  func.func @transform_2(%arg0: i32) -> (i32, i32) {
    %c0_i32 = arith.constant 0 : i32
    %c0_i32_0 = arith.constant 0 : i32
    return %arg0, %c0_i32 : i32, i32
  }
}

</mosaic_0001>

<llo_original>
// kernel: tpu_custom_call.1
$region0: #{tpu_custom_call.1}
  #allocation0 [shape = 'u32[]', space=smem, size = 0x4, offset = 0x4, fixed_abs, tag = 'smem constant byte address 0x4 - core index']
  #allocation1 [shape = 'u32[144,128]{1,0:T(1,128)}', space=vmem, size = 0x12000, scoped, tag = 'internal scratch']
  #allocation2 [shape = 'f32[1]{0:T(128)S(6)}', space=smem, size = 0x200, scoped, tag = 'scoped memory for tpu_custom_call.1']
  %s0 = inlined_call_operand.<no memory space> [shape: f32[1], index: 0, kind: input, shape index: {}]
  %s1 = inlined_call_operand.hbm [shape: f32[2,1024], index: 1, kind: input, shape index: {}]
  %s2 = inlined_call_operand.hbm [shape: f32[2,1024], index: 2, kind: output, shape index: {}]
  %s3 = sld [smem:[#allocation0]]
  $region22: #{tpu_custom_call.1} parent=0
    _
  %s5 = ssub.s32 1, %s3
  %s6 = scalar_select 0, %s5, %s3
  %7 = sst [smem:[#allocation2]] %s0
  $region1: #{tpu_custom_call.1} parent=0
    #allocation3 [shape = 'u8[8192]{0}', space=vmem, size = 0x2000, scoped, tag = 'input window, operand 1, single buffered']
    #allocation4 [shape = 's32[1]{0}', space=sflag, size = 0x4, scoped, tag = 'scoped memory for tpu_custom_call.1']
    #allocation5 [shape = 's32[1]{0}', space=sflag, size = 0x4, scoped, tag = 'scoped memory for tpu_custom_call.1']
    #allocation6 [shape = 'u8[8192]{0}', space=vmem, size = 0x2000, scoped, tag = 'output window, operand 0, single buffered']
    %8 = vsyncpa [#allocation4], 0
    %9 = vsyncpa [#allocation5], 0
    // Predicated region
    $region2: #{tpu_custom_call.1} parent=1 // pred_check
      _
    $region3: #{tpu_custom_call.1} parent=1 // pred_check_branch
      %11 = sbr.rel (0) target = $region5
    $region4: #{tpu_custom_call.1} parent=1 // pred_region
      _
    $region5: #{tpu_custom_call.1} parent=1 // pred_fallthru
      _
    // Predicated region
    $region6: #{tpu_custom_call.1} parent=1 // pred_check
      _
    $region7: #{tpu_custom_call.1} parent=1 // pred_check_branch
      %13 = sbr.rel (0) target = $region9
    $region8: #{tpu_custom_call.1} parent=1 // pred_region
      %s15 = ssub.s32 256, 256
      %16 = vsyncadd [#allocation4], %s15
      %s18 = sshll.u32 [#allocation3], 4
      %s19 = int_to_ptr.vmem [resolvable:$true] %s18
      %21 = dma.hbm_to_vmem [thread:$0]  %s1, 256, %s19, [#allocation4]
    $region9: #{tpu_custom_call.1} parent=1 // pred_fallthru
      _
    // Predicated region
    $region10: #{tpu_custom_call.1} parent=1 // pred_check
      _
    $region11: #{tpu_custom_call.1} parent=1 // pred_check_branch
      %23 = sbr.rel (0) target = $region13
    $region12: #{tpu_custom_call.1} parent=1 // pred_region
      %24 = dma.done [#allocation4], 256
    $region13: #{tpu_custom_call.1} parent=1 // pred_fallthru
      _
    %s25 = sld [smem:[#allocation2]]
    %v26 = vld [vmem:[#allocation3] sm:$0xff]
    %v27 = vld [vmem:[#allocation3 + $0x8] sm:$0xff]
    %v28 = vstv %s25
    %v29 = vmul.f32 %v26, %v28
    %v30 = vmul.f32 %v27, %v28
    %31 = vst [vmem:[#allocation6] sm:$0xff] %v29
    %32 = vst [vmem:[#allocation6 + $0x8] sm:$0xff] %v30
    // Predicated region
    $region14: #{tpu_custom_call.1} parent=1 // pred_check
      _
    $region15: #{tpu_custom_call.1} parent=1 // pred_check_branch
      %34 = sbr.rel (0) target = $region17
    $region16: #{tpu_custom_call.1} parent=1 // pred_region
      %s36 = ssub.s32 256, 256
      %37 = vsyncadd [#allocation5], %s36
      %s39 = sshll.u32 [#allocation6], 4
      %s40 = int_to_ptr.vmem [resolvable:$true] %s39
      %42 = dma.vmem_to_hbm [thread:$0]  %s40, 256, %s2, [#allocation5]
    $region17: #{tpu_custom_call.1} parent=1 // pred_fallthru
      _
    // Predicated region
    $region18: #{tpu_custom_call.1} parent=1 // pred_check
      _
    $region19: #{tpu_custom_call.1} parent=1 // pred_check_branch
      %44 = sbr.rel (0) target = $region21
    $region20: #{tpu_custom_call.1} parent=1 // pred_region
      %45 = dma.done [#allocation5], 256
    $region21: #{tpu_custom_call.1} parent=1 // pred_fallthru
      _
    %46 = vsyncpa [#allocation4], 1
    %47 = vsyncpa [#allocation5], 1

</llo_original>
